<compile_context>
chip_gen: v7x
topology: tpu7x:2x2x1
jax: 0.10.0
libtpu: 0.0.40
codegen_flags: <defaults>
</compile_context>

<pallas_src>
import math

import jax
import jax.numpy as jnp
from jax.experimental import pallas as pl
from jax.experimental.pallas import tpu as pltpu


def _round_up(v, m):
    return (v + m - 1) // m * m


def _nac_kernel(x_ref, w_hat_ref, m_hat_ref, o_ref, w_gate_ref):
    # Batch axis is innermost (program_id(1)); a fresh weight tile is entered
    # exactly when the batch tile index wraps to 0, so only then recompute the
    # tanh * sigmoid gate (3 transcendentals/elem on the single EUP slot).
    @pl.when(pl.program_id(1) == 0)
    def _():
        w_gate_ref[...] = jnp.tanh(w_hat_ref[...]) * jax.nn.sigmoid(m_hat_ref[...])

    # Plain NN matmul on the MXU: (tm, Kp) @ (Kp, tn) -> (tm, tn), f32 acc.
    o_ref[...] = jnp.dot(
        x_ref[...], w_gate_ref[...], preferred_element_type=jnp.float32
    ).astype(o_ref.dtype)


def _pick_tiles(batch, out_dim, in_dim):
    """Tile sizes: 8-aligned batch tile, 128-aligned lane-dense out tile."""
    kp = _round_up(in_dim, 128)                      # lane-aligned K (zero pad)
    tm = 256 if batch >= 256 else _round_up(batch, 8)
    if out_dim <= 128:
        tn = 128
    elif out_dim <= 256:
        tn = 256
    else:
        tn = 512
    # Keep the double-buffered footprint (x, 2 weight inputs, out, gate
    # scratch) well inside the default scoped-VMEM budget on all generations
    # (v7x physical VMEM is 64 MiB; scoped default 32 MiB).
    budget = 24 * 1024 * 1024
    while tn > 128 and (2 * tm * kp + 5 * kp * tn + 2 * tm * tn) * 4 > budget:
        tn //= 2
    return tm, tn, kp


def nac_forward(x, w_hat, m_hat):
    """NeuralAccumulatorCell forward: (B, in_dim) -> (B, out_dim)."""
    batch, in_dim = x.shape
    out_dim, in_dim_w = w_hat.shape
    assert in_dim == in_dim_w and m_hat.shape == (out_dim, in_dim)

    tm, tn, kp = _pick_tiles(batch, out_dim, in_dim)
    mp = _round_up(batch, tm)
    np_ = _round_up(out_dim, tn)

    # Layout plumbing outside the kernel: (out_dim, in_dim) -> (in_dim, out_dim)
    # so the MXU consumes an untransposed RHS and the output is lane-dense.
    w_hat_t = jnp.transpose(w_hat)
    m_hat_t = jnp.transpose(m_hat)

    # Zero padding is semantics-preserving: padded K rows gate to
    # tanh(0)*sigmoid(0) = 0, padded M rows / N cols are sliced off below.
    x_p = jnp.pad(x, ((0, mp - batch), (0, kp - in_dim)))
    wh_p = jnp.pad(w_hat_t, ((0, kp - in_dim), (0, np_ - out_dim)))
    mh_p = jnp.pad(m_hat_t, ((0, kp - in_dim), (0, np_ - out_dim)))

    grid = (np_ // tn, mp // tm)  # (out_dim tiles, batch tiles); batch innermost

    out_padded = pl.pallas_call(
        _nac_kernel,
        out_shape=jax.ShapeDtypeStruct((mp, np_), x.dtype),
        grid_spec=pltpu.PrefetchScalarGridSpec(
            num_scalar_prefetch=0,
            grid=grid,
            in_specs=[
                pl.BlockSpec((tm, kp), lambda n, m: (m, 0)),   # x
                pl.BlockSpec((kp, tn), lambda n, m: (0, n)),   # w_hat^T
                pl.BlockSpec((kp, tn), lambda n, m: (0, n)),   # m_hat^T
            ],
            out_specs=pl.BlockSpec((tm, tn), lambda n, m: (m, n)),
            scratch_shapes=[pltpu.VMEM((kp, tn), jnp.float32)],  # cached gate
        ),
        compiler_params=pltpu.CompilerParams(
            # out_dim tiles independent -> parallel (v7x megacore);
            # batch axis carries the cached-gate dependency -> arbitrary.
            dimension_semantics=("parallel", "arbitrary"),
        ),
    )(x_p, wh_p, mh_p)

    return out_padded[:batch, :out_dim]


def kaiming_uniform(key, out_dim, in_dim, dtype=jnp.float32):
    # Matches nn.init.kaiming_uniform_ defaults (a=0, fan_in mode,
    # leaky_relu gain = sqrt(2)):  bound = sqrt(2) * sqrt(3 / fan_in)
    bound = math.sqrt(2.0) * math.sqrt(3.0 / in_dim)
    return jax.random.uniform(
        key, (out_dim, in_dim), dtype=dtype, minval=-bound, maxval=bound
    )


def reference_nac(x, w_hat, m_hat):
    w = jnp.tanh(w_hat) * jax.nn.sigmoid(m_hat)
    return jnp.dot(x, w.T, precision=jax.lax.Precision.HIGHEST)


if __name__ == "__main__":
    key = jax.random.PRNGKey(0)

    # Case 1: tiny demo shape matching the module spec (single-tile path).
    batch, in_dim, out_dim = 8, 32, 16
    kx, kw, km, k2x, k2w, k2m = jax.random.split(key, 6)

    x = jax.random.normal(kx, (batch, in_dim), dtype=jnp.float32)
    w_hat = kaiming_uniform(kw, out_dim, in_dim)
    m_hat = kaiming_uniform(km, out_dim, in_dim)

    y = nac_forward(x, w_hat, m_hat)
    jax.block_until_ready(y)

    y_ref = reference_nac(x, w_hat, m_hat)
    assert y.shape == (batch, out_dim)
    assert jnp.allclose(y, y_ref, atol=1e-5, rtol=1e-5), "mismatch vs reference (small)"

    # Case 2: larger shape exercising the tiled grid (2 out-dim tiles x
    # 2 batch tiles), the cached-gate reuse across batch tiles, and padding.
    batch2, in2, out2 = 512, 192, 520
    x2 = jax.random.normal(k2x, (batch2, in2), dtype=jnp.float32)
    w_hat2 = kaiming_uniform(k2w, out2, in2)
    m_hat2 = kaiming_uniform(k2m, out2, in2)

    y2 = nac_forward(x2, w_hat2, m_hat2)
    jax.block_until_ready(y2)

    y2_ref = reference_nac(x2, w_hat2, m_hat2)
    assert y2.shape == (batch2, out2)
    assert jnp.allclose(y2, y2_ref, atol=1e-4, rtol=1e-4), "mismatch vs reference (tiled)"

    print("KERNEL_OK")
</pallas_src>

<mosaic_0001>
module attributes {stable_mosaic.version = 11 : i64} {
  func.func @_nac_kernel(%arg0: i32, %arg1: i32, %arg2: memref<8x128xf32, #tpu.memory_space<vmem>>, %arg3: memref<128x128xf32, #tpu.memory_space<vmem>>, %arg4: memref<128x128xf32, #tpu.memory_space<vmem>>, %arg5: memref<8x128xf32, #tpu.memory_space<vmem>>, %arg6: memref<128x128xf32, #tpu.memory_space<vmem>>) attributes {dimension_semantics = [#tpu.dimension_semantics<parallel>, #tpu.dimension_semantics<arbitrary>], iteration_bounds = array<i64: 1, 1>, scalar_prefetch = 0 : i64, scratch_operands = 1 : i64, tpu.core_type = #tpu.core_type<tc>, window_params = [{transform_indices = @transform_0, window_bounds = array<i64: 8, 128>}, {transform_indices = @transform_1, window_bounds = array<i64: 128, 128>}, {transform_indices = @transform_2, window_bounds = array<i64: 128, 128>}, {transform_indices = @transform_3, window_bounds = array<i64: 8, 128>}]} {
    %c0_i32 = arith.constant 0 : i32
    %0 = arith.cmpi eq, %arg1, %c0_i32 : i32
    %1 = arith.extui %0 : i1 to i32
    %c0_i32_0 = arith.constant 0 : i32
    %2 = arith.cmpi ne, %1, %c0_i32_0 : i32
    scf.if %2 {
      %c0_6 = arith.constant 0 : index
      %c0_7 = arith.constant 0 : index
      %7 = vector.load %arg3[%c0_6, %c0_7] : memref<128x128xf32, #tpu.memory_space<vmem>>, vector<128x128xf32>
      %8 = math.tanh %7 : vector<128x128xf32>
      %c0_8 = arith.constant 0 : index
      %c0_9 = arith.constant 0 : index
      %9 = vector.load %arg4[%c0_8, %c0_9] : memref<128x128xf32, #tpu.memory_space<vmem>>, vector<128x128xf32>
      %10 = arith.negf %9 : vector<128x128xf32>
      %11 = math.exp %10 : vector<128x128xf32>
      %cst_10 = arith.constant 1.000000e+00 : f32
      %12 = vector.broadcast %cst_10 : f32 to vector<128x128xf32>
      %13 = arith.addf %12, %11 : vector<128x128xf32>
      %14 = arith.divf %12, %13 : vector<128x128xf32>
      %15 = arith.mulf %8, %14 : vector<128x128xf32>
      %c0_11 = arith.constant 0 : index
      %c0_12 = arith.constant 0 : index
      %16 = vector.load %arg6[%c0_11, %c0_12] : memref<128x128xf32, #tpu.memory_space<vmem>>, vector<128x128xf32>
      tpu.vector_store %arg6[%c0_11, %c0_12], %15 {strides = array<i32>} : memref<128x128xf32, #tpu.memory_space<vmem>>, vector<128x128xf32>,
    } else {
    }
    %c0 = arith.constant 0 : index
    %c0_1 = arith.constant 0 : index
    %3 = vector.load %arg2[%c0, %c0_1] : memref<8x128xf32, #tpu.memory_space<vmem>>, vector<8x128xf32>
    %c0_2 = arith.constant 0 : index
    %c0_3 = arith.constant 0 : index
    %4 = vector.load %arg6[%c0_2, %c0_3] : memref<128x128xf32, #tpu.memory_space<vmem>>, vector<128x128xf32>
    %cst = arith.constant dense<0.000000e+00> : vector<8x128xf32>
    %5 = tpu.matmul %3, %4, %cst {dimension_numbers = #tpu.dot_dimension_numbers<[1], [0], [0], [1], [0, 0, 1, 1], [], []>} : vector<8x128xf32>, vector<128x128xf32>, vector<8x128xf32> -> vector<8x128xf32>
    %c0_4 = arith.constant 0 : index
    %c0_5 = arith.constant 0 : index
    %6 = vector.load %arg5[%c0_4, %c0_5] : memref<8x128xf32, #tpu.memory_space<vmem>>, vector<8x128xf32>
    tpu.vector_store %arg5[%c0_4, %c0_5], %5 {strides = array<i32>} : memref<8x128xf32, #tpu.memory_space<vmem>>, vector<8x128xf32>,
    return
  }
  func.func @transform_0(%arg0: i32, %arg1: i32) -> (i32, i32) {
    %c0_i32 = arith.constant 0 : i32
    %c0_i32_0 = arith.constant 0 : i32
    return %arg1, %c0_i32 : i32, i32
  }
  func.func @transform_1(%arg0: i32, %arg1: i32) -> (i32, i32) {
    %c0_i32 = arith.constant 0 : i32
    %c0_i32_0 = arith.constant 0 : i32
    return %c0_i32, %arg0 : i32, i32
  }
  func.func @transform_2(%arg0: i32, %arg1: i32) -> (i32, i32) {
    %c0_i32 = arith.constant 0 : i32
    %c0_i32_0 = arith.constant 0 : i32
    return %c0_i32, %arg0 : i32, i32
  }
  func.func @transform_3(%arg0: i32, %arg1: i32) -> (i32, i32) {
    %c0_i32 = arith.constant 0 : i32
    return %arg1, %arg0 : i32, i32
  }
}

</mosaic_0001>

<llo_original>
// kernel: tpu_custom_call.1
$region0: #{tpu_custom_call.1}
  #allocation0 [shape = 'u32[]', space=smem, size = 0x4, offset = 0x4, fixed_abs, tag = 'smem constant byte address 0x4 - core index']
  #allocation1 [shape = 'u32[144,128]{1,0:T(1,128)}', space=vmem, size = 0x12000, scoped, tag = 'internal scratch']
  #allocation2 [shape = 'f32[128,128]{1,0:T(8,128)}', space=vmem, size = 0x10000, scoped, tag = 'scratch operand']
  %s0 = inlined_call_operand.hbm [shape: f32[8,128], index: 0, kind: input, shape index: {}]
  %s1 = inlined_call_operand.hbm [shape: f32[128,128], index: 1, kind: input, shape index: {}]
  %s2 = inlined_call_operand.hbm [shape: f32[128,128], index: 2, kind: input, shape index: {}]
  %s3 = inlined_call_operand.hbm [shape: f32[8,128], index: 3, kind: output, shape index: {}]
  %s4 = sld [smem:[#allocation0]]
  $region38: #{tpu_custom_call.1} parent=0
    _
  %s6 = ssub.s32 1, %s4
  %s7 = scalar_select 0, %s6, %s4
  $region1: #{tpu_custom_call.1} parent=0
    #allocation3 [shape = 'u8[4096]{0}', space=vmem, size = 0x1000, scoped, tag = 'input window, operand 0, single buffered']
    #allocation4 [shape = 's32[1]{0}', space=sflag, size = 0x4, scoped, tag = 'scoped memory for tpu_custom_call.1']
    #allocation5 [shape = 's32[1]{0}', space=sflag, size = 0x4, scoped, tag = 'scoped memory for tpu_custom_call.1']
    #allocation6 [shape = 'u8[65536]{0}', space=vmem, size = 0x10000, scoped, tag = 'input window, operand 1, single buffered']
    #allocation7 [shape = 's32[1]{0}', space=sflag, size = 0x4, scoped, tag = 'scoped memory for tpu_custom_call.1']
    #allocation8 [shape = 'u8[65536]{0}', space=vmem, size = 0x10000, scoped, tag = 'input window, operand 2, single buffered']
    #allocation9 [shape = 'u8[4096]{0}', space=vmem, size = 0x1000, scoped, tag = 'output window, operand 0, single buffered']
    %8 = vsyncpa [#allocation4], 0
    %9 = vsyncpa [#allocation7], 0
    %10 = vsyncpa [#allocation5], 0
    // Predicated region
    $region2: #{tpu_custom_call.1} parent=1 // pred_check
      _
    $region3: #{tpu_custom_call.1} parent=1 // pred_check_branch
      %12 = sbr.rel (0) target = $region5
    $region4: #{tpu_custom_call.1} parent=1 // pred_region
      %s14 = ssub.s32 128, 128
      %15 = vsyncadd [#allocation4], %s14
      %s17 = sshll.u32 [#allocation3], 4
      %s18 = int_to_ptr.vmem [resolvable:$true] %s17
      %20 = dma.hbm_to_vmem [thread:$0]  %s0, 128, %s18, [#allocation4]
    $region5: #{tpu_custom_call.1} parent=1 // pred_fallthru
      _
    // Predicated region
    $region6: #{tpu_custom_call.1} parent=1 // pred_check
      _
    $region7: #{tpu_custom_call.1} parent=1 // pred_check_branch
      %22 = sbr.rel (0) target = $region9
    $region8: #{tpu_custom_call.1} parent=1 // pred_region
      %s24 = ssub.s32 2048, 2048
      %25 = vsyncadd [#allocation7], %s24
      %s26 = sshll.u32 [#allocation6], 4
      %s27 = int_to_ptr.vmem [resolvable:$true] %s26
      %32 = dma.hbm_to_vmem [thread:$0]  %s1, 2048, %s27, [#allocation7], 128, 128, 8
    $region9: #{tpu_custom_call.1} parent=1 // pred_fallthru
      _
    // Predicated region
    $region10: #{tpu_custom_call.1} parent=1 // pred_check
      _
    $region11: #{tpu_custom_call.1} parent=1 // pred_check_branch
      %34 = sbr.rel (0) target = $region13
    $region12: #{tpu_custom_call.1} parent=1 // pred_region
      %s36 = ssub.s32 2048, 2048
      %37 = vsyncadd [#allocation7], %s36
      %s38 = sshll.u32 [#allocation8], 4
      %s39 = int_to_ptr.vmem [resolvable:$true] %s38
      %44 = dma.hbm_to_vmem [thread:$0]  %s2, 2048, %s39, [#allocation7], 128, 128, 8
    $region13: #{tpu_custom_call.1} parent=1 // pred_fallthru
      _
    // Predicated region
    $region14: #{tpu_custom_call.1} parent=1 // pred_check
      _
    $region15: #{tpu_custom_call.1} parent=1 // pred_check_branch
      %46 = sbr.rel (0) target = $region17
    $region16: #{tpu_custom_call.1} parent=1 // pred_region
      %47 = dma.done [#allocation4], 128
    $region17: #{tpu_custom_call.1} parent=1 // pred_fallthru
      _
    // Predicated region
    $region18: #{tpu_custom_call.1} parent=1 // pred_check
      _
    $region19: #{tpu_custom_call.1} parent=1 // pred_check_branch
      %49 = sbr.rel (0) target = $region21
    $region20: #{tpu_custom_call.1} parent=1 // pred_region
      %50 = dma.done [#allocation7], 2048
    $region21: #{tpu_custom_call.1} parent=1 // pred_fallthru
      _
    // Predicated region
    $region22: #{tpu_custom_call.1} parent=1 // pred_check
      _
    $region23: #{tpu_custom_call.1} parent=1 // pred_check_branch
      %52 = sbr.rel (0) target = $region25
    $region24: #{tpu_custom_call.1} parent=1 // pred_region
      %53 = dma.done [#allocation7], 2048
    $region25: #{tpu_custom_call.1} parent=1 // pred_fallthru
      _
    %p54 = scmp.eq.s32.totalorder 0, 0
    // Predicated region
    $region26: #{tpu_custom_call.1} parent=1 // pred_check
      %p55 = pneg %p54
    $region27: #{tpu_custom_call.1} parent=1 // pred_check_branch
      %57 = sbr.rel (%p55) target = $region29
    $region28: #{tpu_custom_call.1} parent=1 // pred_region
      %v58 = vld [vmem:[#allocation6] sm:$0xff]
      %v59 = vld [vmem:[#allocation6 + $0x8] sm:$0xff]
      %v60 = vld [vmem:[#allocation6 + $0x10] sm:$0xff]
      %v61 = vld [vmem:[#allocation6 + $0x18] sm:$0xff]
      %v62 = vld [vmem:[#allocation6 + $0x20] sm:$0xff]
      %v63 = vld [vmem:[#allocation6 + $0x28] sm:$0xff]
      %v64 = vld [vmem:[#allocation6 + $0x30] sm:$0xff]
      %v65 = vld [vmem:[#allocation6 + $0x38] sm:$0xff]
      %v66 = vld [vmem:[#allocation6 + $0x40] sm:$0xff]
      %v67 = vld [vmem:[#allocation6 + $0x48] sm:$0xff]
      %v68 = vld [vmem:[#allocation6 + $0x50] sm:$0xff]
      %v69 = vld [vmem:[#allocation6 + $0x58] sm:$0xff]
      %v70 = vld [vmem:[#allocation6 + $0x60] sm:$0xff]
      %v71 = vld [vmem:[#allocation6 + $0x68] sm:$0xff]
      %v72 = vld [vmem:[#allocation6 + $0x70] sm:$0xff]
      %v73 = vld [vmem:[#allocation6 + $0x78] sm:$0xff]
      %v74 = vtanh.pop %v58
      %v75 = vtanh.pop %v59
      %v76 = vtanh.pop %v60
      %v77 = vtanh.pop %v61
      %v78 = vtanh.pop %v62
      %v79 = vtanh.pop %v63
      %v80 = vtanh.pop %v64
      %v81 = vtanh.pop %v65
      %v82 = vtanh.pop %v66
      %v83 = vtanh.pop %v67
      %v84 = vtanh.pop %v68
      %v85 = vtanh.pop %v69
      %v86 = vtanh.pop %v70
      %v87 = vtanh.pop %v71
      %v88 = vtanh.pop %v72
      %v89 = vtanh.pop %v73
      %v90 = vld [vmem:[#allocation8] sm:$0xff]
      %v91 = vld [vmem:[#allocation8 + $0x8] sm:$0xff]
      %v92 = vld [vmem:[#allocation8 + $0x10] sm:$0xff]
      %v93 = vld [vmem:[#allocation8 + $0x18] sm:$0xff]
      %v94 = vld [vmem:[#allocation8 + $0x20] sm:$0xff]
      %v95 = vld [vmem:[#allocation8 + $0x28] sm:$0xff]
      %v96 = vld [vmem:[#allocation8 + $0x30] sm:$0xff]
      %v97 = vld [vmem:[#allocation8 + $0x38] sm:$0xff]
      %v98 = vld [vmem:[#allocation8 + $0x40] sm:$0xff]
      %v99 = vld [vmem:[#allocation8 + $0x48] sm:$0xff]
      %v100 = vld [vmem:[#allocation8 + $0x50] sm:$0xff]
      %v101 = vld [vmem:[#allocation8 + $0x58] sm:$0xff]
      %v102 = vld [vmem:[#allocation8 + $0x60] sm:$0xff]
      %v103 = vld [vmem:[#allocation8 + $0x68] sm:$0xff]
      %v104 = vld [vmem:[#allocation8 + $0x70] sm:$0xff]
      %v105 = vld [vmem:[#allocation8 + $0x78] sm:$0xff]
      %v106 = vxor.u32 %v90, 2147483648
      %v107 = vxor.u32 %v91, 2147483648
      %v108 = vxor.u32 %v92, 2147483648
      %v109 = vxor.u32 %v93, 2147483648
      %v110 = vxor.u32 %v94, 2147483648
      %v111 = vxor.u32 %v95, 2147483648
      %v112 = vxor.u32 %v96, 2147483648
      %v113 = vxor.u32 %v97, 2147483648
      %v114 = vxor.u32 %v98, 2147483648
      %v115 = vxor.u32 %v99, 2147483648
      %v116 = vxor.u32 %v100, 2147483648
      %v117 = vxor.u32 %v101, 2147483648
      %v118 = vxor.u32 %v102, 2147483648
      %v119 = vxor.u32 %v103, 2147483648
      %v120 = vxor.u32 %v104, 2147483648
      %v121 = vxor.u32 %v105, 2147483648
      %v122 = vmul.f32 %v106, 1.442695
      %v123 = vpow.pop %v122
      %v124 = vmul.f32 %v107, 1.442695
      %v125 = vpow.pop %v124
      %v126 = vmul.f32 %v108, 1.442695
      %v127 = vpow.pop %v126
      %v128 = vmul.f32 %v109, 1.442695
      %v129 = vpow.pop %v128
      %v130 = vmul.f32 %v110, 1.442695
      %v131 = vpow.pop %v130
      %v132 = vmul.f32 %v111, 1.442695
      %v133 = vpow.pop %v132
      %v134 = vmul.f32 %v112, 1.442695
      %v135 = vpow.pop %v134
      %v136 = vmul.f32 %v113, 1.442695
      %v137 = vpow.pop %v136
      %v138 = vmul.f32 %v114, 1.442695
      %v139 = vpow.pop %v138
      %v140 = vmul.f32 %v115, 1.442695
      %v141 = vpow.pop %v140
      %v142 = vmul.f32 %v116, 1.442695
      %v143 = vpow.pop %v142
      %v144 = vmul.f32 %v117, 1.442695
      %v145 = vpow.pop %v144
      %v146 = vmul.f32 %v118, 1.442695
      %v147 = vpow.pop %v146
      %v148 = vmul.f32 %v119, 1.442695
      %v149 = vpow.pop %v148
      %v150 = vmul.f32 %v120, 1.442695
      %v151 = vpow.pop %v150
      %v152 = vmul.f32 %v121, 1.442695
      %v153 = vpow.pop %v152
      %v154 = vadd.f32 %v123, 1.0
      %v155 = vadd.f32 %v125, 1.0
      %v156 = vadd.f32 %v127, 1.0
      %v157 = vadd.f32 %v129, 1.0
      %v158 = vadd.f32 %v131, 1.0
      %v159 = vadd.f32 %v133, 1.0
      %v160 = vadd.f32 %v135, 1.0
      %v161 = vadd.f32 %v137, 1.0
      %v162 = vadd.f32 %v139, 1.0
      %v163 = vadd.f32 %v141, 1.0
      %v164 = vadd.f32 %v143, 1.0
      %v165 = vadd.f32 %v145, 1.0
      %v166 = vadd.f32 %v147, 1.0
      %v167 = vadd.f32 %v149, 1.0
      %v168 = vadd.f32 %v151, 1.0
      %v169 = vadd.f32 %v153, 1.0
      %v170 = vrcp.pop %v154
      %v171 = vmul.f32 1.0, %v170
      %v172 = vrcp.pop %v155
      %v173 = vmul.f32 1.0, %v172
      %v174 = vrcp.pop %v156
      %v175 = vmul.f32 1.0, %v174
      %v176 = vrcp.pop %v157
      %v177 = vmul.f32 1.0, %v176
      %v178 = vrcp.pop %v158
      %v179 = vmul.f32 1.0, %v178
      %v180 = vrcp.pop %v159
      %v181 = vmul.f32 1.0, %v180
      %v182 = vrcp.pop %v160
      %v183 = vmul.f32 1.0, %v182
      %v184 = vrcp.pop %v161
      %v185 = vmul.f32 1.0, %v184
      %v186 = vrcp.pop %v162
      %v187 = vmul.f32 1.0, %v186
      %v188 = vrcp.pop %v163
      %v189 = vmul.f32 1.0, %v188
      %v190 = vrcp.pop %v164
      %v191 = vmul.f32 1.0, %v190
      %v192 = vrcp.pop %v165
      %v193 = vmul.f32 1.0, %v192
      %v194 = vrcp.pop %v166
      %v195 = vmul.f32 1.0, %v194
      %v196 = vrcp.pop %v167
      %v197 = vmul.f32 1.0, %v196
      %v198 = vrcp.pop %v168
      %v199 = vmul.f32 1.0, %v198
      %v200 = vrcp.pop %v169
      %v201 = vmul.f32 1.0, %v200
      %v202 = vmul.f32 %v74, %v171
      %v203 = vmul.f32 %v75, %v173
      %v204 = vmul.f32 %v76, %v175
      %v205 = vmul.f32 %v77, %v177
      %v206 = vmul.f32 %v78, %v179
      %v207 = vmul.f32 %v79, %v181
      %v208 = vmul.f32 %v80, %v183
      %v209 = vmul.f32 %v81, %v185
      %v210 = vmul.f32 %v82, %v187
      %v211 = vmul.f32 %v83, %v189
      %v212 = vmul.f32 %v84, %v191
      %v213 = vmul.f32 %v85, %v193
      %v214 = vmul.f32 %v86, %v195
      %v215 = vmul.f32 %v87, %v197
      %v216 = vmul.f32 %v88, %v199
      %v217 = vmul.f32 %v89, %v201
      %218 = vst [vmem:[#allocation2] sm:$0xff] %v202
      %219 = vst [vmem:[#allocation2 + $0x8] sm:$0xff] %v203
      %220 = vst [vmem:[#allocation2 + $0x10] sm:$0xff] %v204
      %221 = vst [vmem:[#allocation2 + $0x18] sm:$0xff] %v205
      %222 = vst [vmem:[#allocation2 + $0x20] sm:$0xff] %v206
      %223 = vst [vmem:[#allocation2 + $0x28] sm:$0xff] %v207
      %224 = vst [vmem:[#allocation2 + $0x30] sm:$0xff] %v208
      %225 = vst [vmem:[#allocation2 + $0x38] sm:$0xff] %v209
      %226 = vst [vmem:[#allocation2 + $0x40] sm:$0xff] %v210
      %227 = vst [vmem:[#allocation2 + $0x48] sm:$0xff] %v211
      %228 = vst [vmem:[#allocation2 + $0x50] sm:$0xff] %v212
      %229 = vst [vmem:[#allocation2 + $0x58] sm:$0xff] %v213
      %230 = vst [vmem:[#allocation2 + $0x60] sm:$0xff] %v214
      %231 = vst [vmem:[#allocation2 + $0x68] sm:$0xff] %v215
      %232 = vst [vmem:[#allocation2 + $0x70] sm:$0xff] %v216
      %233 = vst [vmem:[#allocation2 + $0x78] sm:$0xff] %v217
    $region29: #{tpu_custom_call.1} parent=1 // pred_fallthru
      _
    %v234 = vld [vmem:[#allocation3] sm:$0xff]
    %v235 = vld [vmem:[#allocation2] sm:$0xff]
    %v236 = vld [vmem:[#allocation2 + $0x8] sm:$0xff]
    %v237 = vld [vmem:[#allocation2 + $0x10] sm:$0xff]
    %v238 = vld [vmem:[#allocation2 + $0x18] sm:$0xff]
    %v239 = vld [vmem:[#allocation2 + $0x20] sm:$0xff]
    %v240 = vld [vmem:[#allocation2 + $0x28] sm:$0xff]
    %v241 = vld [vmem:[#allocation2 + $0x30] sm:$0xff]
    %v242 = vld [vmem:[#allocation2 + $0x38] sm:$0xff]
    %v243 = vld [vmem:[#allocation2 + $0x40] sm:$0xff]
    %v244 = vld [vmem:[#allocation2 + $0x48] sm:$0xff]
    %v245 = vld [vmem:[#allocation2 + $0x50] sm:$0xff]
    %v246 = vld [vmem:[#allocation2 + $0x58] sm:$0xff]
    %v247 = vld [vmem:[#allocation2 + $0x60] sm:$0xff]
    %v248 = vld [vmem:[#allocation2 + $0x68] sm:$0xff]
    %v249 = vld [vmem:[#allocation2 + $0x70] sm:$0xff]
    %v250 = vld [vmem:[#allocation2 + $0x78] sm:$0xff]
    %251 = vmatprep.subr.mxu0 0.0
    %252 = vmatpush1.msra.mxu0 %v235
    %253 = vmatprep.subr.mxu0 0.0
    %254 = vmatpush1.msra.mxu0 %v236
    %255 = vmatprep.subr.mxu0 0.0
    %256 = vmatpush1.msra.mxu0 %v237
    %257 = vmatprep.subr.mxu0 0.0
    %258 = vmatpush1.msra.mxu0 %v238
    %259 = vmatprep.subr.mxu0 0.0
    %260 = vmatpush1.msra.mxu0 %v239
    %261 = vmatprep.subr.mxu0 0.0
    %262 = vmatpush1.msra.mxu0 %v240
    %263 = vmatprep.subr.mxu0 0.0
    %264 = vmatpush1.msra.mxu0 %v241
    %265 = vmatprep.subr.mxu0 0.0
    %266 = vmatpush1.msra.mxu0 %v242
    %267 = vmatprep.subr.mxu0 0.0
    %268 = vmatpush1.msra.mxu0 %v243
    %269 = vmatprep.subr.mxu0 0.0
    %270 = vmatpush1.msra.mxu0 %v244
    %271 = vmatprep.subr.mxu0 0.0
    %272 = vmatpush1.msra.mxu0 %v245
    %273 = vmatprep.subr.mxu0 0.0
    %274 = vmatpush1.msra.mxu0 %v246
    %275 = vmatprep.subr.mxu0 0.0
    %276 = vmatpush1.msra.mxu0 %v247
    %277 = vmatprep.subr.mxu0 0.0
    %278 = vmatpush1.msra.mxu0 %v248
    %279 = vmatprep.subr.mxu0 0.0
    %280 = vmatpush1.msra.mxu0 %v249
    %281 = vmatprep.subr.mxu0 0.0
    %282 = vmatpush1.msra.mxu0 %v250
    %283 = vmatprep.subr.mxu0 0.0
    %284 = vmatpush1.msra.mxu0 0.0
    %285 = vmatprep.subr.mxu0 0.0
    %286 = vmatpush1.msra.mxu0 0.0
    %287 = vmatprep.subr.mxu0 0.0
    %288 = vmatpush1.msra.mxu0 0.0
    %289 = vmatprep.subr.mxu0 0.0
    %290 = vmatpush1.msra.mxu0 0.0
    %291 = vmatprep.subr.mxu0 0.0
    %292 = vmatpush1.msra.mxu0 0.0
    %293 = vmatprep.subr.mxu0 0.0
    %294 = vmatpush1.msra.mxu0 0.0
    %295 = vmatprep.subr.mxu0 0.0
    %296 = vmatpush1.msra.mxu0 0.0
    %297 = vmatprep.subr.mxu0 0.0
    %298 = vmatpush1.msra.mxu0 0.0
    %299 = vmatprep.subr.mxu0 0.0
    %300 = vmatpush1.msra.mxu0 0.0
    %301 = vmatprep.subr.mxu0 0.0
    %302 = vmatpush1.msra.mxu0 0.0
    %303 = vmatprep.subr.mxu0 0.0
    %304 = vmatpush1.msra.mxu0 0.0
    %305 = vmatprep.subr.mxu0 0.0
    %306 = vmatpush1.msra.mxu0 0.0
    %307 = vmatprep.subr.mxu0 0.0
    %308 = vmatpush1.msra.mxu0 0.0
    %309 = vmatprep.subr.mxu0 0.0
    %310 = vmatpush1.msra.mxu0 0.0
    %311 = vmatprep.subr.mxu0 0.0
    %312 = vmatpush1.msra.mxu0 0.0
    %313 = vmatprep.subr.mxu0 0.0
    %314 = vmatpush1.msra.mxu0 0.0
    %315 = vmatprep.mubr.f32.mxu0 0.0
    %316 = vmatmul.mubr.f32.gmra.mrb[0].mxu0 %v234
    %v317 = vpop.f32.mrb[0].mxu0
    %v318 = vadd.f32 0.0, %v317
    %v319 = vpop.f32.mrb[0].mxu0
    %320 = vdwg.mxu0
    %321 = vst [vmem:[#allocation9] sm:$0xff] %v318
    // Predicated region
    $region30: #{tpu_custom_call.1} parent=1 // pred_check
      _
    $region31: #{tpu_custom_call.1} parent=1 // pred_check_branch
      %323 = sbr.rel (0) target = $region33
    $region32: #{tpu_custom_call.1} parent=1 // pred_region
      %s325 = ssub.s32 128, 128
      %326 = vsyncadd [#allocation5], %s325
      %s328 = sshll.u32 [#allocation9], 4
      %s329 = int_to_ptr.vmem [resolvable:$true] %s328
      %331 = dma.vmem_to_hbm [thread:$0]  %s329, 128, %s3, [#allocation5]
    $region33: #{tpu_custom_call.1} parent=1 // pred_fallthru
      _
    // Predicated region
    $region34: #{tpu_custom_call.1} parent=1 // pred_check
      _
    $region35: #{tpu_custom_call.1} parent=1 // pred_check_branch
      %333 = sbr.rel (0) target = $region37
    $region36: #{tpu_custom_call.1} parent=1 // pred_region
      %334 = dma.done [#allocation5], 128
    $region37: #{tpu_custom_call.1} parent=1 // pred_fallthru
      _
    %335 = vsyncpa [#allocation4], 1
    %336 = vsyncpa [#allocation7], 1
    %337 = vsyncpa [#allocation5], 1

</llo_original>
